<compile_context>
chip_gen: v6e
topology: v6e:2x2x1
jax: 0.10.0
libtpu: 0.0.40
codegen_flags: <defaults>
</compile_context>

<pallas_src>
import functools

import jax
import jax.numpy as jnp
from jax.experimental import pallas as pl
from jax.experimental.pallas import tpu as pltpu


def _label_smoothing_kernel(pred_ref, tgt_ref, out_ref, *, confidence, smoothing,
                            total_n, tiles_per_chunk):
    p = pl.program_id(0)          # parallel chunk (maps to a TensorCore on v7x)
    i = pl.program_id(1)          # row-tile index within the chunk (reduction)

    x = pred_ref[...].astype(jnp.float32)                     # (T, C) f32 working copy
    t, c = x.shape

    # Numerically stable log-softmax pieces; all class-axis reductions are taken
    # directly on x so `shifted` is never a standalone (T, C) temporary (it only
    # feeds exp):
    #   sum_c(logp)  = sum_c(x) - C*m - C*lse
    #   logp[target] = x[target] - m - lse
    m = jnp.max(x, axis=-1, keepdims=True)                     # (T, 1)
    sum_x = jnp.sum(x, axis=-1, keepdims=True)                 # (T, 1)

    tgt = tgt_ref[...]                                         # (T, 1) int32
    col = jax.lax.broadcasted_iota(jnp.int32, (t, c), 1)       # (T, C)
    # NOTE: out-of-range target ids silently contribute 0 here (PyTorch would raise).
    target_x = jnp.sum(jnp.where(col == tgt, x, 0.0), axis=-1, keepdims=True)

    lse = jnp.log(jnp.sum(jnp.exp(x - m), axis=-1, keepdims=True))   # (T, 1)

    target_logp = (target_x - m) - lse                         # (T, 1)
    sum_logp = (sum_x - jnp.float32(c) * m) - jnp.float32(c) * lse   # (T, 1)

    per_row = -(jnp.float32(confidence) * target_logp
                + jnp.float32(smoothing / c) * sum_logp)       # (T, 1)

    # Mask rows past the true batch size: padded rows of the last partial tile
    # AND entire clamped over-the-end tiles (their virtual row index >= total_n),
    # so garbage/NaN contributions are forced to exactly 0 before the reduce.
    block_idx = p * tiles_per_chunk + i
    row = block_idx * t + jax.lax.broadcasted_iota(jnp.int32, (t, 1), 0)
    per_row = jnp.where(row < total_n, per_row, 0.0)

    partial = jnp.sum(per_row)                                 # scalar f32

    @pl.when(i == 0)
    def _():
        out_ref[...] = jnp.zeros_like(out_ref)

    out_ref[...] += partial      # scalar broadcast into the chunk's (1, 8, 128) slab


def _vmem_capacity_bytes():
    """Physical VMEM of the attached TPU (128 MiB v5e/v6e, 64 MiB v7x)."""
    try:
        cap = getattr(pltpu.get_tpu_info(), "vmem_capacity_bytes", None)
        if cap:
            return int(cap)
    except Exception:
        pass
    return 64 << 20   # conservative fallback (v7x-sized)


def _max_tile_rows(n, c, itemsize, granule, budget_bytes):
    """Largest row tile whose working set fits the VMEM budget (granule-rounded)."""
    # Per pred element: double-buffered native-dtype input + ~20 B of live
    # f32/int32 temporaries (f32 copy, exp result, iota/compare, select) before
    # Mosaic fusion; + small per-row extras (target ids, (T,1) reductions).
    per_row_bytes = c * (2 * itemsize + 20) + 64
    max_rows = max(int(budget_bytes // per_row_bytes), 1)
    if max_rows >= n:
        return n                                   # full rows in a single block
    tile = (max_rows // granule) * granule
    if tile == 0:
        # TODO(synk): for extremely large C (f32 vocab >~ 256K) add a second
        # (class) grid axis with an online max / sum-exp so row tiles stay large.
        tile = granule
    return tile


def label_smoothing_loss(pred, target, smoothing=0.1, tile_n=None):
    """pred: (N, C) float (any float dtype), target: (N,) int -> scalar f32 loss."""
    confidence = 1.0 - smoothing
    n, c = pred.shape
    itemsize = jnp.dtype(pred.dtype).itemsize
    granule = {1: 32, 2: 16}.get(itemsize, 8)      # sublane packing granule

    # Generation-aware VMEM sizing: use most of the chip's VMEM for the tile
    # working set instead of a fixed v7x-sized budget.
    vmem_cap = _vmem_capacity_bytes()
    vmem_limit = max(32 << 20, min((vmem_cap * 3) // 4, 112 << 20))
    budget = max(16 << 20, vmem_limit - (8 << 20))

    max_tile = _max_tile_rows(n, c, itemsize, granule, budget)   # always <= n
    if tile_n is None:
        tile_n = max_tile                           # no artificial row cap
    else:
        tile_n = int(tile_n)
        if tile_n < n:                              # round to the sublane granule
            tile_n = max(granule, (tile_n // granule) * granule)
        tile_n = min(tile_n, max_tile) if tile_n < n else min(tile_n, n)

    total_tiles = pl.cdiv(n, tile_n)

    # Split the row tiles into 2 "parallel" chunks so v7x's two TensorCores each
    # reduce half of them; on 1-TC v5e/v6e the parallel axis simply serializes.
    num_chunks = 2 if total_tiles >= 2 else 1
    tiles_per_chunk = pl.cdiv(total_tiles, num_chunks)
    last_block = total_tiles - 1

    def row_map(p, i):
        # Clamp over-the-end steps of the last chunk onto the final valid block;
        # the kernel masks their (re-read) rows to zero.
        return (jnp.minimum(p * tiles_per_chunk + i, last_block), 0)

    tgt2d = target.astype(jnp.int32).reshape(n, 1)

    kernel = functools.partial(
        _label_smoothing_kernel,
        confidence=float(confidence),
        smoothing=float(smoothing),
        total_n=n,
        tiles_per_chunk=tiles_per_chunk,
    )

    # Per-chunk accumulators live in an (8, 128)-aligned f32 slab so the output
    # BlockSpec satisfies the TPU tiling constraint; element [p, 0, 0] carries
    # the chunk's partial sum (the whole slab holds the same broadcast value).
    out = pl.pallas_call(
        kernel,
        out_shape=jax.ShapeDtypeStruct((num_chunks, 8, 128), jnp.float32),
        grid=(num_chunks, tiles_per_chunk),
        in_specs=[
            pl.BlockSpec((tile_n, c), row_map),     # pred row tile, native dtype
            pl.BlockSpec((tile_n, 1), row_map),     # matching target ids
        ],
        out_specs=pl.BlockSpec((1, 8, 128), lambda p, i: (p, 0, 0)),
        compiler_params=pltpu.CompilerParams(
            dimension_semantics=("parallel", "arbitrary"),
            vmem_limit_bytes=vmem_limit,
        ),
    )(pred, tgt2d)

    # Final mean over the true row count (kept out of the kernel so each chunk
    # only accumulates raw partial sums — also tighter numerically for huge N).
    return jnp.sum(out[:, 0, 0]) / jnp.float32(n)


def _reference_loss(pred, target, smoothing=0.1):
    confidence = 1.0 - smoothing
    logp = jax.nn.log_softmax(pred.astype(jnp.float32), axis=-1)
    c = pred.shape[-1]
    true_dist = confidence * jax.nn.one_hot(target, c, dtype=jnp.float32) + smoothing / c
    return jnp.mean(jnp.sum(-true_dist * logp, axis=-1))


if __name__ == "__main__":
    key = jax.random.PRNGKey(0)
    k1, k2, k3, k4, k5, k6 = jax.random.split(key, 6)
    smoothing = 0.1

    # Case 1: tiny single-tile f32 problem (num_chunks == 1 path).
    N1, C1 = 8, 32
    pred1 = jax.random.normal(k1, (N1, C1), dtype=jnp.float32)
    tgt1 = jax.random.randint(k2, (N1,), 0, C1, dtype=jnp.int32)
    loss1 = jax.block_until_ready(label_smoothing_loss(pred1, tgt1, smoothing))
    ref1 = _reference_loss(pred1, tgt1, smoothing)
    assert jnp.allclose(loss1, ref1, atol=1e-5, rtol=1e-5), (loss1, ref1)

    # Case 2: bf16 kept in its native dtype into the kernel, explicit tile_n,
    # two parallel chunks with one clamped over-the-end step AND a masked
    # partial last tile (40 rows = 2 full 16-row tiles + 8).
    N2, C2 = 40, 128
    pred2 = jax.random.normal(k3, (N2, C2), dtype=jnp.float32).astype(jnp.bfloat16)
    tgt2 = jax.random.randint(k4, (N2,), 0, C2, dtype=jnp.int32)
    loss2 = jax.block_until_ready(
        label_smoothing_loss(pred2, tgt2, smoothing, tile_n=16))
    ref2 = _reference_loss(pred2, tgt2, smoothing)
    assert jnp.allclose(loss2, ref2, atol=1e-4, rtol=1e-4), (loss2, ref2)

    # Case 3: f32, evenly divisible multi-tile grid split across both chunks.
    N3, C3 = 64, 512
    pred3 = jax.random.normal(k5, (N3, C3), dtype=jnp.float32)
    tgt3 = jax.random.randint(k6, (N3,), 0, C3, dtype=jnp.int32)
    loss3 = jax.block_until_ready(
        label_smoothing_loss(pred3, tgt3, smoothing, tile_n=8))
    ref3 = _reference_loss(pred3, tgt3, smoothing)
    assert jnp.allclose(loss3, ref3, atol=1e-5, rtol=1e-5), (loss3, ref3)

    print("KERNEL_OK")
</pallas_src>

<mosaic_0001>
module attributes {stable_mosaic.version = 11 : i64} {
  func.func @_label_smoothing_kernel(%arg0: i32, %arg1: i32, %arg2: memref<8x32xf32, #tpu.memory_space<vmem>>, %arg3: memref<8x1xi32, #tpu.memory_space<vmem>>, %arg4: memref<1x8x128xf32, #tpu.memory_space<vmem>>) attributes {dimension_semantics = [#tpu.dimension_semantics<parallel>, #tpu.dimension_semantics<arbitrary>], iteration_bounds = array<i64: 1, 1>, scalar_prefetch = 0 : i64, scratch_operands = 0 : i64, tpu.core_type = #tpu.core_type<tc>, window_params = [{transform_indices = @transform_0, window_bounds = array<i64: 8, 32>}, {transform_indices = @transform_1, window_bounds = array<i64: 8, 1>}, {transform_indices = @transform_2, window_bounds = array<i64: 1, 8, 128>}]} {
    %c0 = arith.constant 0 : index
    %c0_0 = arith.constant 0 : index
    %0 = vector.load %arg2[%c0, %c0_0] : memref<8x32xf32, #tpu.memory_space<vmem>>, vector<8x32xf32>
    %cst = arith.constant dense<0xFF800000> : vector<8xf32>
    %1 = vector.multi_reduction <maximumf>, %0, %cst [1] : vector<8x32xf32> to vector<8xf32>
    %2 = vector.shape_cast %1 : vector<8xf32> to vector<8x1xf32>
    %cst_1 = arith.constant dense<0.000000e+00> : vector<8xf32>
    %3 = vector.multi_reduction <add>, %0, %cst_1 [1] : vector<8x32xf32> to vector<8xf32>
    %4 = vector.shape_cast %3 : vector<8xf32> to vector<8x1xf32>
    %c0_2 = arith.constant 0 : index
    %c0_3 = arith.constant 0 : index
    %5 = vector.load %arg3[%c0_2, %c0_3] : memref<8x1xi32, #tpu.memory_space<vmem>>, vector<8x1xi32>
    %6 = tpu.iota {dimensions = array<i32: 1>} : vector<8x32xi32>
    %7 = vector.broadcast %5 : vector<8x1xi32> to vector<8x32xi32>
    %8 = arith.cmpi eq, %6, %7 : vector<8x32xi32>
    %cst_4 = arith.constant 0.000000e+00 : f32
    %9 = vector.broadcast %cst_4 : f32 to vector<8x32xf32>
    %10 = arith.select %8, %0, %9 : vector<8x32xi1>, vector<8x32xf32>
    %cst_5 = arith.constant dense<0.000000e+00> : vector<8xf32>
    %11 = vector.multi_reduction <add>, %10, %cst_5 [1] : vector<8x32xf32> to vector<8xf32>
    %12 = vector.shape_cast %11 : vector<8xf32> to vector<8x1xf32>
    %13 = vector.broadcast %2 : vector<8x1xf32> to vector<8x32xf32>
    %14 = arith.subf %0, %13 : vector<8x32xf32>
    %15 = math.exp %14 : vector<8x32xf32>
    %cst_6 = arith.constant dense<0.000000e+00> : vector<8xf32>
    %16 = vector.multi_reduction <add>, %15, %cst_6 [1] : vector<8x32xf32> to vector<8xf32>
    %17 = vector.shape_cast %16 : vector<8xf32> to vector<8x1xf32>
    %18 = math.log %17 : vector<8x1xf32>
    %19 = arith.subf %12, %2 : vector<8x1xf32>
    %20 = arith.subf %19, %18 : vector<8x1xf32>
    %cst_7 = arith.constant 3.200000e+01 : f32
    %21 = vector.broadcast %cst_7 : f32 to vector<8x1xf32>
    %22 = arith.mulf %21, %2 : vector<8x1xf32>
    %23 = arith.subf %4, %22 : vector<8x1xf32>
    %cst_8 = arith.constant 3.200000e+01 : f32
    %24 = vector.broadcast %cst_8 : f32 to vector<8x1xf32>
    %25 = arith.mulf %24, %18 : vector<8x1xf32>
    %26 = arith.subf %23, %25 : vector<8x1xf32>
    %cst_9 = arith.constant 0.899999976 : f32
    %27 = vector.broadcast %cst_9 : f32 to vector<8x1xf32>
    %28 = arith.mulf %27, %20 : vector<8x1xf32>
    %cst_10 = arith.constant 3.125000e-03 : f32
    %29 = vector.broadcast %cst_10 : f32 to vector<8x1xf32>
    %30 = arith.mulf %29, %26 : vector<8x1xf32>
    %31 = arith.addf %28, %30 : vector<8x1xf32>
    %cst_11 = arith.constant 0.000000e+00 : f32
    %32 = vector.broadcast %cst_11 : f32 to vector<8x1xf32>
    %33 = arith.subf %32, %31 : vector<8x1xf32>
    %c1_i32 = arith.constant 1 : i32
    %34 = arith.muli %arg0, %c1_i32 : i32
    %35 = arith.addi %34, %arg1 : i32
    %c8_i32 = arith.constant 8 : i32
    %36 = arith.muli %35, %c8_i32 : i32
    %37 = tpu.iota {dimensions = array<i32: 0>} : vector<8x1xi32>
    %38 = vector.broadcast %36 : i32 to vector<8x1xi32>
    %39 = arith.addi %38, %37 : vector<8x1xi32>
    %c8_i32_12 = arith.constant 8 : i32
    %40 = vector.broadcast %c8_i32_12 : i32 to vector<8x1xi32>
    %41 = arith.cmpi slt, %39, %40 : vector<8x1xi32>
    %cst_13 = arith.constant 0.000000e+00 : f32
    %42 = vector.broadcast %cst_13 : f32 to vector<8x1xf32>
    %43 = arith.select %41, %33, %42 : vector<8x1xi1>, vector<8x1xf32>
    %44 = vector.shape_cast %43 : vector<8x1xf32> to vector<1x8x1xf32>
    %cst_14 = arith.constant dense<0.000000e+00> : vector<1xf32>
    %45 = vector.multi_reduction <add>, %44, %cst_14 [1, 2] : vector<1x8x1xf32> to vector<1xf32>
    %46 = vector.shape_cast %45 : vector<1xf32> to vector<1x1x1xf32>
    %47 = vector.extract %46[0, 0, 0] : f32 from vector<1x1x1xf32>
    %c0_i32 = arith.constant 0 : i32
    %48 = arith.cmpi eq, %arg1, %c0_i32 : i32
    %49 = arith.extui %48 : i1 to i32
    %c0_i32_15 = arith.constant 0 : i32
    %50 = arith.cmpi ne, %49, %c0_i32_15 : i32
    scf.if %50 {
      %cst_22 = arith.constant 0.000000e+00 : f32
      %55 = vector.broadcast %cst_22 : f32 to vector<1x8x128xf32>
      %c0_23 = arith.constant 0 : index
      %c0_24 = arith.constant 0 : index
      %c0_25 = arith.constant 0 : index
      %56 = vector.load %arg4[%c0_23, %c0_24, %c0_25] : memref<1x8x128xf32, #tpu.memory_space<vmem>>, vector<1x8x128xf32>
      tpu.vector_store %arg4[%c0_23, %c0_24, %c0_25], %55 {strides = array<i32>} : memref<1x8x128xf32, #tpu.memory_space<vmem>>, vector<1x8x128xf32>,
    } else {
    }
    %c0_16 = arith.constant 0 : index
    %c0_17 = arith.constant 0 : index
    %c0_18 = arith.constant 0 : index
    %51 = vector.load %arg4[%c0_16, %c0_17, %c0_18] : memref<1x8x128xf32, #tpu.memory_space<vmem>>, vector<1x8x128xf32>
    %52 = vector.broadcast %47 : f32 to vector<1x8x128xf32>
    %53 = arith.addf %51, %52 : vector<1x8x128xf32>
    %c0_19 = arith.constant 0 : index
    %c0_20 = arith.constant 0 : index
    %c0_21 = arith.constant 0 : index
    %54 = vector.load %arg4[%c0_19, %c0_20, %c0_21] : memref<1x8x128xf32, #tpu.memory_space<vmem>>, vector<1x8x128xf32>
    tpu.vector_store %arg4[%c0_19, %c0_20, %c0_21], %53 {strides = array<i32>} : memref<1x8x128xf32, #tpu.memory_space<vmem>>, vector<1x8x128xf32>,
    return
  }
  func.func @transform_0(%arg0: i32, %arg1: i32) -> (i32, i32) {
    %c1_i32 = arith.constant 1 : i32
    %0 = arith.muli %arg0, %c1_i32 : i32
    %1 = arith.addi %0, %arg1 : i32
    %c0_i32 = arith.constant 0 : i32
    %2 = arith.minsi %1, %c0_i32 : i32
    %c0_i32_0 = arith.constant 0 : i32
    %c0_i32_1 = arith.constant 0 : i32
    return %2, %c0_i32_0 : i32, i32
  }
  func.func @transform_1(%arg0: i32, %arg1: i32) -> (i32, i32) {
    %c1_i32 = arith.constant 1 : i32
    %0 = arith.muli %arg0, %c1_i32 : i32
    %1 = arith.addi %0, %arg1 : i32
    %c0_i32 = arith.constant 0 : i32
    %2 = arith.minsi %1, %c0_i32 : i32
    %c0_i32_0 = arith.constant 0 : i32
    %c0_i32_1 = arith.constant 0 : i32
    return %2, %c0_i32_0 : i32, i32
  }
  func.func @transform_2(%arg0: i32, %arg1: i32) -> (i32, i32, i32) {
    %c0_i32 = arith.constant 0 : i32
    %c0_i32_0 = arith.constant 0 : i32
    %c0_i32_1 = arith.constant 0 : i32
    return %arg0, %c0_i32, %c0_i32_0 : i32, i32, i32
  }
}

</mosaic_0001>

<llo_original>
// kernel: tpu_custom_call.1
$region0: #{tpu_custom_call.1}
  #allocation0 [shape = 'u32[]', space=smem, size = 0x4, offset = 0x4, fixed_abs, tag = 'smem constant byte address 0x4 - core index']
  #allocation1 [shape = 'u32[144,128]{1,0:T(1,128)}', space=vmem, size = 0x12000, scoped, tag = 'internal scratch']
  %s0 = inlined_call_operand.vmem [shape: f32[8,32], index: 0, kind: input, shape index: {}]
  %s1 = inlined_call_operand.vmem [shape: s32[8,1], index: 1, kind: input, shape index: {}]
  %s2 = inlined_call_operand.hbm [shape: f32[1,8,128], index: 2, kind: output, shape index: {}]
  %s3 = sld [smem:[#allocation0]]
  $region22: #{tpu_custom_call.1} parent=0
    _
  %s5 = ssub.s32 1, %s3
  %s6 = scalar_select 0, %s5, %s3
  $region1: #{tpu_custom_call.1} parent=0
    #allocation2 [shape = 'u8[4096]{0}', space=vmem, size = 0x1000, scoped, tag = 'output window, operand 0, single buffered']
    #allocation3 [shape = 's32[1]{0}', space=sflag, size = 0x4, scoped, tag = 'scoped memory for tpu_custom_call.1']
    %7 = vsyncpa [#allocation3], 0
    // Predicated region
    $region2: #{tpu_custom_call.1} parent=1 // pred_check
      _
    $region3: #{tpu_custom_call.1} parent=1 // pred_check_branch
      %9 = sbr.rel (0) target = $region5
    $region4: #{tpu_custom_call.1} parent=1 // pred_region
      %s10 = sadd.s32 0, 0
      %p11 = scmp.lt.s32.totalorder %s10, 0
      %s12 = scalar_select %p11, %s10, 0
      %p13 = scmp.lt.s32.totalorder %s12, 0
      %s14 = scalar_select %p13, %s12, 0
      %s15 = smul.addr %s14, 8
      %s16 = scalar_lea.vmem %s0, %s15
      %s17 = sadd.s32 0, 0
      %p18 = scmp.lt.s32.totalorder %s17, 0
      %s19 = scalar_select %p18, %s17, 0
    $region5: #{tpu_custom_call.1} parent=1 // pred_fallthru
      _
    // Predicated region
    $region6: #{tpu_custom_call.1} parent=1 // pred_check
      _
    $region7: #{tpu_custom_call.1} parent=1 // pred_check_branch
      %21 = sbr.rel (0) target = $region9
    $region8: #{tpu_custom_call.1} parent=1 // pred_region
      %s22 = sadd.s32 0, 0
      %p23 = scmp.lt.s32.totalorder %s22, 0
      %s24 = scalar_select %p23, %s22, 0
      %p25 = scmp.lt.s32.totalorder %s24, 0
      %s26 = scalar_select %p25, %s24, 0
      %s27 = smul.addr %s26, 8
      %s28 = scalar_lea.vmem %s1, %s27
      %s29 = sadd.s32 0, 0
      %p30 = scmp.lt.s32.totalorder %s29, 0
      %s31 = scalar_select %p30, %s29, 0
    $region9: #{tpu_custom_call.1} parent=1 // pred_fallthru
      _
    %s32 = sadd.s32 0, 0
    %p33 = scmp.lt.s32.totalorder %s32, 0
    %s34 = scalar_select %p33, %s32, 0
    %p35 = scmp.lt.s32.totalorder %s34, 0
    %s36 = scalar_select %p35, %s34, 0
    %s37 = smul.addr %s36, 8
    %s38 = scalar_lea.vmem %s0, %s37
    %s39 = sadd.s32 0, 0
    %p40 = scmp.lt.s32.totalorder %s39, 0
    %s41 = scalar_select %p40, %s39, 0
    %p42 = scmp.lt.s32.totalorder %s41, 0
    %s43 = scalar_select %p42, %s41, 0
    %s44 = smul.addr %s43, 8
    %s45 = scalar_lea.vmem %s1, %s44
    %s46 = sadd.s32 0, 0
    %p47 = scmp.lt.s32.totalorder %s46, 0
    %s48 = scalar_select %p47, %s46, 0
    %p49 = scmp.lt.s32.totalorder %s48, 0
    %s50 = scalar_select %p49, %s48, 0
    %s51 = smul.addr %s50, 8
    %s52 = scalar_lea.vmem %s0, %s51
    %s53 = sadd.s32 0, 0
    %p54 = scmp.lt.s32.totalorder %s53, 0
    %s55 = scalar_select %p54, %s53, 0
    %s56 = sadd.s32 0, 0
    %p57 = scmp.lt.s32.totalorder %s56, 0
    %s58 = scalar_select %p57, %s56, 0
    %p59 = scmp.lt.s32.totalorder %s58, 0
    %s60 = scalar_select %p59, %s58, 0
    %s61 = smul.addr %s60, 8
    %s62 = scalar_lea.vmem %s1, %s61
    %s63 = sadd.s32 0, 0
    %p64 = scmp.lt.s32.totalorder %s63, 0
    %s65 = scalar_select %p64, %s63, 0
    %v66 = vld [vmem:[%s52] sm:$0xff]
    %vm67 = vcmask 261120
    %v68 = vsel %vm67, %v66, -inf
    %69 = vmax.xlane.f32.xlu0 %v68
    %v70 = vpop.xlane.xlu0 %69
    %v71 = vsel %vm67, %v66, 0.0
    %72 = vadd.xlane.f32.xlu0 %v71
    %v73 = vpop.xlane.xlu0 %72
    %v74 = vld [vmem:[%s62] sm:$0xff]
    %v75 = vlaneseq
    %v76 = vand.u32 %v75, 127
    %77 = vset.pattern.permute.xlu0 0
    %78 = vperm.xlu0 %77, %v74
    %v79 = vpop.permute.xlu0 %78
    %vm80 = vcmp.eq.s32.totalorder %v76, %v79
    %v81 = vsel %vm80, %v66, 0.0
    %v82 = vsel %vm67, %v81, 0.0
    %83 = vadd.xlane.f32.xlu0 %v82
    %v84 = vpop.xlane.xlu0 %83
    %v85 = vsub.f32 %v66, %v70
    %v86 = vmul.f32 %v85, 1.442695
    %v87 = vpow.pop %v86
    %v88 = vsel %vm67, %v87, 0.0
    %89 = vadd.xlane.f32.xlu0 %v88
    %v90 = vpop.xlane.xlu0 %89
    %v91 = vlog2.pop %v90
    %v92 = vmul.f32 %v91, 0.6931472
    %v93 = vsub.f32 %v84, %v70
    %v94 = vsub.f32 %v93, %v92
    %v95 = vmul.f32 %v70, 32.0
    %v96 = vsub.f32 %v73, %v95
    %v97 = vmul.f32 %v92, 32.0
    %v98 = vsub.f32 %v96, %v97
    %v99 = vmul.f32 %v94, 0.9
    %v100 = vmul.f32 %v98, 0.003125
    %v101 = vadd.f32 %v99, %v100
    %v102 = vsub.f32 0.0, %v101
    %s103 = sadd.s32 0, 0
    %s104 = smul.u32 %s103, 8
    %v105 = vlaneseq
    %v106 = vshrl.u32 %v105, 7
    %v107 = vstv %s104
    %v108 = vadd.s32 %v107, %v106
    %vm109 = vcmp.lt.s32.totalorder %v108, 8
    %v110 = vsel %vm109, %v102, 0.0
    %vm111 = vcmask 7168
    %v112 = vsel %vm111, %v110, 0.0
    %113 = vadd.xlane.f32.xlu0 %v112
    %v114 = vpop.xlane.xlu0 %113
    %v115 = vrot.slane %v114, 4
    %v116 = vadd.f32 %v114, %v115
    %v117 = vrot.slane %v116, 2
    %v118 = vadd.f32 %v116, %v117
    %v119 = vrot.slane %v118, 1
    %v120 = vadd.f32 %v118, %v119
    %s121 = vtos %v120
    %p122 = scmp.eq.s32.totalorder 0, 0
    // Predicated region
    $region10: #{tpu_custom_call.1} parent=1 // pred_check
      %p123 = pneg %p122
    $region11: #{tpu_custom_call.1} parent=1 // pred_check_branch
      %125 = sbr.rel (%p123) target = $region13
    $region12: #{tpu_custom_call.1} parent=1 // pred_region
      %126 = vst [vmem:[#allocation2] sm:$0xff] 0.0
    $region13: #{tpu_custom_call.1} parent=1 // pred_fallthru
      _
    %v127 = vld [vmem:[#allocation2] sm:$0xff]
    %v128 = vstv %s121
    %v129 = vadd.f32 %v127, %v128
    %130 = vst [vmem:[#allocation2] sm:$0xff] %v129
    // Predicated region
    $region14: #{tpu_custom_call.1} parent=1 // pred_check
      _
    $region15: #{tpu_custom_call.1} parent=1 // pred_check_branch
      %132 = sbr.rel (0) target = $region17
    $region16: #{tpu_custom_call.1} parent=1 // pred_region
      %s134 = ssub.s32 128, 128
      %135 = vsyncadd [#allocation3], %s134
      %s137 = sshll.u32 [#allocation2], 4
      %s138 = int_to_ptr.vmem [resolvable:$true] %s137
      %140 = dma.vmem_to_hbm [thread:$0]  %s138, 128, %s2, [#allocation3]
    $region17: #{tpu_custom_call.1} parent=1 // pred_fallthru
      _
    // Predicated region
    $region18: #{tpu_custom_call.1} parent=1 // pred_check
      _
    $region19: #{tpu_custom_call.1} parent=1 // pred_check_branch
      %142 = sbr.rel (0) target = $region21
    $region20: #{tpu_custom_call.1} parent=1 // pred_region
      %143 = dma.done [#allocation3], 128
    $region21: #{tpu_custom_call.1} parent=1 // pred_fallthru
      _
    %144 = vsyncpa [#allocation3], 1

</llo_original>
